<compile_context>
chip_gen: v7x
topology: tpu7x:2x2x1
jax: 0.10.0
libtpu: 0.0.40
codegen_flags: <defaults>
</compile_context>

<pallas_src>
import functools

import jax
import jax.numpy as jnp
from jax import lax
from jax.experimental import pallas as pl
from jax.experimental.pallas import tpu as pltpu


def get_configuration(loss: str):
    # Mirrors the helper in the PyTorch repo: "<method>_<reduction>".
    method, reduction = loss.split("_")
    assert method in ("local", "pairwise")
    assert reduction in ("mean", "min", "max")
    return method, reduction


def _mc_ntxent_kernel(p1_ref, p2_ref, loss_ref, *, temperature: float,
                      use_static_max: bool):
    # Blocks: p1_ref / p2_ref (mc_tile, n_batch, d); loss_ref (mc_tile, 1, 2*n_batch).
    mt, nb, d = p1_ref.shape
    b = 2 * nb
    inv_t = jnp.float32(1.0 / temperature)
    eps2 = jnp.float32(1e-24)  # (1e-12)^2, F.normalize eps

    p1 = p1_ref[...].astype(jnp.float32)  # (mt, nb, d)
    p2 = p2_ref[...].astype(jnp.float32)

    # F.normalize(x, dim=-1): x / max(||x||, eps) == x * rsqrt(max(||x||^2, eps^2))
    z1 = p1 * lax.rsqrt(jnp.maximum(jnp.sum(p1 * p1, axis=-1, keepdims=True), eps2))
    z2 = p2 * lax.rsqrt(jnp.maximum(jnp.sum(p2 * p2, axis=-1, keepdims=True), eps2))

    # Positives: row i and row i+nb share the same positive <z1_i, z2_i>/T,
    # so compute it once per pair and tile (no swapped-halves buffer).
    pos_half = jnp.sum(z1 * z2, axis=-1) * inv_t              # (mt, nb) f32
    pos = jnp.concatenate([pos_half, pos_half], axis=1)       # (mt, b)  f32

    # MXU operands built directly in bf16 (no f32 z is ever materialized);
    # 1/temperature is folded into the LHS so no b^2 scaling pass is needed.
    lhs = jnp.concatenate([(z1 * inv_t).astype(jnp.bfloat16),
                           (z2 * inv_t).astype(jnp.bfloat16)], axis=1)  # (mt, b, d)
    rhs = jnp.concatenate([z1.astype(jnp.bfloat16),
                           z2.astype(jnp.bfloat16)], axis=1)            # (mt, b, d)

    # A.B^T contraction over the minor (lane) dims; checked so no hidden rhs
    # transpose (vxpose) is needed on the XLU.
    sim = jnp.einsum("mid,mjd->mij", lhs, rhs,
                     preferred_element_type=jnp.float32)      # (mt, b, b) f32

    # Single additive (b, b) diagonal mask (0 off-diag, -inf on diag), broadcast
    # over the MC dim: one VPU add instead of iota pairs + compare + select.
    row = lax.broadcasted_iota(jnp.int32, (b, b), 0)
    col = lax.broadcasted_iota(jnp.int32, (b, b), 1)
    mask = jnp.where(row == col, -jnp.inf, 0.0).astype(jnp.float32)
    sim = sim + mask[None, :, :]

    if use_static_max:
        # Rows are L2-normalized -> sim <= 1/T, so the running-max pass is not
        # needed (wrapper guarantees 2/T stays well below the f32 exp underflow).
        lse = inv_t + jnp.log(jnp.sum(jnp.exp(sim - inv_t), axis=-1))   # (mt, b)
    else:
        m = jnp.max(sim, axis=-1, keepdims=True)                        # (mt, b, 1)
        lse = m[..., 0] + jnp.log(jnp.sum(jnp.exp(sim - m), axis=-1))   # (mt, b)

    loss_ref[...] = (pos - lse)[:, None, :]  # lane-dense (mt, 1, b) store


def _physical_vmem_bytes() -> int:
    try:
        info = pltpu.get_tpu_info()
        return int(getattr(info, "vmem_capacity_bytes", 64 << 20))
    except Exception:
        return 64 << 20


def _per_mc_vmem_bytes(n_batch: int, d: int, in_bytes: int) -> int:
    b = 2 * n_batch
    io = 2 * 2 * n_batch * d * in_bytes + 2 * b * 4   # double-buffered inputs + out row
    zbuf = 2 * n_batch * d * 4                        # z1, z2 f32
    mxu = 2 * b * d * 2                               # bf16 lhs + rhs
    simlike = 4 * b * b * 4                           # sim, masked sim, exp, reduce temps
    return io + zbuf + mxu + simlike


def _pick_mc_tile(n_mc: int, per_mc: int, budget: int) -> int:
    # Keep >=2 grid steps so input DMA overlaps compute (and both v7x TCs can
    # split the MC axis); pick the largest divisor of n_mc that fits the budget.
    cap = max(n_mc // 2, 1) if n_mc > 1 else 1
    best = 1
    for t in range(1, n_mc + 1):
        if n_mc % t == 0 and t <= cap and t * per_mc <= budget:
            best = t
    return best


def mc_ntxent(p1, p2, *, loss: str = "local_mean", temperature: float = 0.1,
              mc_tile=None):
    method, reduction = get_configuration(loss)
    if method != "local":
        # TODO(synk): 'pairwise' method (full (n_mc*2B)^2 similarity) not implemented here.
        raise NotImplementedError("only the 'local' method is implemented")

    n_mc, n_batch, d = p1.shape
    b = 2 * n_batch

    # No wrapper-side padding: BlockSpec last two dims equal the full array dims,
    # which is legal for any n_batch / d (unaligned dims only cost masked loads),
    # and avoids an extra HBM read+write of both inputs.
    # TODO(synk): for n_batch % 8 != 0 a pad-plus-(-inf)-column-mask variant would
    # make every load/concat/MXU tile aligned; skipped to keep the softmax exact.

    in_bytes = jnp.dtype(p1.dtype).itemsize  # bf16 inputs halve HBM traffic (v5e/v6e)
    phys_vmem = _physical_vmem_bytes()
    budget = min(int(phys_vmem * 0.45), 56 << 20)
    per_mc = _per_mc_vmem_bytes(n_batch, d, in_bytes)

    if mc_tile is None:
        mc_tile = _pick_mc_tile(n_mc, per_mc, budget)
    assert n_mc % mc_tile == 0
    grid = (n_mc // mc_tile,)

    needed = mc_tile * per_mc
    # Never request more than the physical VMEM of this generation (v7x: 64 MiB).
    vmem_limit = int(min(max(2 * needed, 32 << 20), phys_vmem - (8 << 20)))

    # Static-max logsumexp is safe when 2/T stays well below f32 exp underflow.
    use_static_max = float(temperature) >= 0.025

    kernel = functools.partial(_mc_ntxent_kernel,
                               temperature=float(temperature),
                               use_static_max=use_static_max)
    loss_mat = pl.pallas_call(
        kernel,
        out_shape=jax.ShapeDtypeStruct((n_mc, 1, b), jnp.float32),
        grid_spec=pltpu.PrefetchScalarGridSpec(
            num_scalar_prefetch=0,
            grid=grid,
            in_specs=[
                pl.BlockSpec((mc_tile, n_batch, d), lambda m: (m, 0, 0)),
                pl.BlockSpec((mc_tile, n_batch, d), lambda m: (m, 0, 0)),
            ],
            out_specs=pl.BlockSpec((mc_tile, 1, b), lambda m: (m, 0, 0)),
        ),
        compiler_params=pltpu.CompilerParams(
            # TODO(synk): on v7x, pltpu.CORE_PARALLEL (or pl.core_map) over the MC
            # grid axis would shard the >=2 steps across both TensorCores;
            # "parallel" is the portable choice here.
            dimension_semantics=("parallel",),
            vmem_limit_bytes=vmem_limit,
        ),
    )(p1, p2)  # (n_mc, 1, 2*n_batch), lane-dense

    loss_mat = loss_mat[:, 0, :]  # (n_mc, 2*n_batch)

    # TODO(synk): for very large n_batch (where the (2B)^2 f32 sim exceeds the
    # per-MC VMEM budget) a column-tiled online-softmax (flash-style) variant
    # would be required.

    # Tiny cross-MC reduction stays in plain JAX.
    if reduction == "mean":
        l = jax.nn.logsumexp(loss_mat, axis=0) - jnp.log(jnp.float32(n_mc))
        return -jnp.mean(l)
    elif reduction == "min":
        # log(min(exp(x))) == min(x): same math as PyTorch, without exp underflow.
        return -jnp.mean(jnp.min(loss_mat, axis=0))
    else:  # "max"
        return -jnp.mean(jnp.max(loss_mat, axis=0))


def _reference(p1, p2, temperature, reduction):
    # pure-JAX reference of the 'local' forward pass (for correctness check)
    n_mc, n_batch, d = p1.shape
    b = 2 * n_batch

    def norm(x):
        return x / jnp.maximum(jnp.linalg.norm(x, axis=-1, keepdims=True), 1e-12)

    z = jnp.concatenate([norm(p1), norm(p2)], axis=1)  # (n_mc, b, d)
    sim = jnp.einsum("mid,mjd->mij", z, z)
    eye = jnp.eye(b, dtype=bool)
    sim = jnp.where(eye[None], -jnp.inf, sim) / temperature
    idx = (jnp.arange(b) + n_batch) % b
    pos = jnp.take_along_axis(sim, idx[None, :, None], axis=-1)[..., 0]
    loss = pos - jax.nn.logsumexp(sim, axis=-1)
    if reduction == "mean":
        l = jax.nn.logsumexp(loss, axis=0) - jnp.log(jnp.float32(n_mc))
        return -jnp.mean(l)
    elif reduction == "min":
        return -jnp.mean(jnp.min(loss, axis=0))
    else:
        return -jnp.mean(jnp.max(loss, axis=0))


if __name__ == "__main__":
    key = jax.random.PRNGKey(0)
    n_mc, n_batch, d = 4, 4, 32
    k1, k2 = jax.random.split(key)
    p1 = jax.random.normal(k1, (n_mc, n_batch, d), dtype=jnp.float32)
    p2 = jax.random.normal(k2, (n_mc, n_batch, d), dtype=jnp.float32)

    # bf16 MXU path -> tolerance loosened relative to the f32 reference.
    out = mc_ntxent(p1, p2, loss="local_mean", temperature=0.1)
    out = jax.block_until_ready(out)
    ref = _reference(p1, p2, 0.1, "mean")
    assert jnp.allclose(out, ref, rtol=2e-2, atol=2e-2), (out, ref)

    for red in ("min", "max"):
        o = jax.block_until_ready(mc_ntxent(p1, p2, loss=f"local_{red}", temperature=0.1))
        r = _reference(p1, p2, 0.1, red)
        assert jnp.allclose(o, r, rtol=2e-2, atol=2e-2), (red, o, r)

    print("KERNEL_OK")
</pallas_src>

<mosaic_0001>
module attributes {stable_mosaic.version = 11 : i64} {
  func.func @_mc_ntxent_kernel(%arg0: i32, %arg1: memref<2x4x32xf32, #tpu.memory_space<vmem>>, %arg2: memref<2x4x32xf32, #tpu.memory_space<vmem>>, %arg3: memref<2x1x8xf32, #tpu.memory_space<vmem>>) attributes {dimension_semantics = [#tpu.dimension_semantics<parallel>], iteration_bounds = array<i64: 2>, scalar_prefetch = 0 : i64, scratch_operands = 0 : i64, tpu.core_type = #tpu.core_type<tc>, window_params = [{transform_indices = @transform_0, window_bounds = array<i64: 2, 4, 32>}, {transform_indices = @transform_1, window_bounds = array<i64: 2, 4, 32>}, {transform_indices = @transform_2, window_bounds = array<i64: 2, 1, 8>}]} {
    %c0 = arith.constant 0 : index
    %c0_0 = arith.constant 0 : index
    %c0_1 = arith.constant 0 : index
    %0 = vector.load %arg1[%c0, %c0_0, %c0_1] : memref<2x4x32xf32, #tpu.memory_space<vmem>>, vector<2x4x32xf32>
    %c0_2 = arith.constant 0 : index
    %c0_3 = arith.constant 0 : index
    %c0_4 = arith.constant 0 : index
    %1 = vector.load %arg2[%c0_2, %c0_3, %c0_4] : memref<2x4x32xf32, #tpu.memory_space<vmem>>, vector<2x4x32xf32>
    %2 = arith.mulf %0, %0 : vector<2x4x32xf32>
    %cst = arith.constant dense<0.000000e+00> : vector<2x4xf32>
    %3 = vector.multi_reduction <add>, %2, %cst [2] : vector<2x4x32xf32> to vector<2x4xf32>
    %4 = vector.shape_cast %3 : vector<2x4xf32> to vector<2x4x1xf32>
    %cst_5 = arith.constant 1.000000e-24 : f32
    %5 = vector.broadcast %cst_5 : f32 to vector<2x4x1xf32>
    %6 = arith.maximumf %4, %5 : vector<2x4x1xf32>
    %7 = math.rsqrt %6 : vector<2x4x1xf32>
    %8 = vector.broadcast %7 : vector<2x4x1xf32> to vector<2x4x32xf32>
    %9 = arith.mulf %0, %8 : vector<2x4x32xf32>
    %10 = arith.mulf %1, %1 : vector<2x4x32xf32>
    %cst_6 = arith.constant dense<0.000000e+00> : vector<2x4xf32>
    %11 = vector.multi_reduction <add>, %10, %cst_6 [2] : vector<2x4x32xf32> to vector<2x4xf32>
    %12 = vector.shape_cast %11 : vector<2x4xf32> to vector<2x4x1xf32>
    %cst_7 = arith.constant 1.000000e-24 : f32
    %13 = vector.broadcast %cst_7 : f32 to vector<2x4x1xf32>
    %14 = arith.maximumf %12, %13 : vector<2x4x1xf32>
    %15 = math.rsqrt %14 : vector<2x4x1xf32>
    %16 = vector.broadcast %15 : vector<2x4x1xf32> to vector<2x4x32xf32>
    %17 = arith.mulf %1, %16 : vector<2x4x32xf32>
    %18 = arith.mulf %9, %17 : vector<2x4x32xf32>
    %cst_8 = arith.constant dense<0.000000e+00> : vector<2x4xf32>
    %19 = vector.multi_reduction <add>, %18, %cst_8 [2] : vector<2x4x32xf32> to vector<2x4xf32>
    %cst_9 = arith.constant 1.000000e+01 : f32
    %20 = vector.broadcast %cst_9 : f32 to vector<2x4xf32>
    %21 = arith.mulf %19, %20 : vector<2x4xf32>
    %22 = tpu.concatenate %21, %21 in 1 : vector<2x4xf32>, vector<2x4xf32> -> vector<2x8xf32>
    %cst_10 = arith.constant 1.000000e+01 : f32
    %23 = vector.broadcast %cst_10 : f32 to vector<2x4x32xf32>
    %24 = arith.mulf %9, %23 : vector<2x4x32xf32>
    %25 = arith.truncf %24 : vector<2x4x32xf32> to vector<2x4x32xbf16>
    %cst_11 = arith.constant 1.000000e+01 : f32
    %26 = vector.broadcast %cst_11 : f32 to vector<2x4x32xf32>
    %27 = arith.mulf %17, %26 : vector<2x4x32xf32>
    %28 = arith.truncf %27 : vector<2x4x32xf32> to vector<2x4x32xbf16>
    %29 = tpu.concatenate %25, %28 in 1 : vector<2x4x32xbf16>, vector<2x4x32xbf16> -> vector<2x8x32xbf16>
    %30 = arith.truncf %9 : vector<2x4x32xf32> to vector<2x4x32xbf16>
    %31 = arith.truncf %17 : vector<2x4x32xf32> to vector<2x4x32xbf16>
    %32 = tpu.concatenate %30, %31 in 1 : vector<2x4x32xbf16>, vector<2x4x32xbf16> -> vector<2x8x32xbf16>
    "tpu.trace_start"() <{level = 10 : i32, message = "mid,mjd->mij"}> : () -> ()
    %cst_12 = arith.constant dense<0.000000e+00> : vector<2x8x8xf32>
    %33 = tpu.matmul %29, %32, %cst_12 {dimension_numbers = #tpu.dot_dimension_numbers<[2], [2], [1], [1], [0, 0, 0, 1, 1, 1], [0], [0]>} : vector<2x8x32xbf16>, vector<2x8x32xbf16>, vector<2x8x8xf32> -> vector<2x8x8xf32>
    "tpu.trace_stop"() : () -> ()
    %34 = tpu.iota {dimensions = array<i32: 0>} : vector<8x8xi32>
    %35 = tpu.iota {dimensions = array<i32: 1>} : vector<8x8xi32>
    %36 = arith.cmpi eq, %34, %35 : vector<8x8xi32>
    %cst_13 = arith.constant 0xFF800000 : f32
    %cst_14 = arith.constant 0.000000e+00 : f32
    %37 = vector.broadcast %cst_13 : f32 to vector<8x8xf32>
    %38 = vector.broadcast %cst_14 : f32 to vector<8x8xf32>
    %39 = arith.select %36, %37, %38 : vector<8x8xi1>, vector<8x8xf32>
    %40 = vector.shape_cast %39 : vector<8x8xf32> to vector<1x8x8xf32>
    %41 = vector.broadcast %40 : vector<1x8x8xf32> to vector<2x8x8xf32>
    %42 = arith.addf %33, %41 : vector<2x8x8xf32>
    %cst_15 = arith.constant 1.000000e+01 : f32
    %43 = vector.broadcast %cst_15 : f32 to vector<2x8x8xf32>
    %44 = arith.subf %42, %43 : vector<2x8x8xf32>
    %45 = math.exp %44 : vector<2x8x8xf32>
    %cst_16 = arith.constant dense<0.000000e+00> : vector<2x8xf32>
    %46 = vector.multi_reduction <add>, %45, %cst_16 [2] : vector<2x8x8xf32> to vector<2x8xf32>
    %47 = math.log %46 : vector<2x8xf32>
    %cst_17 = arith.constant 1.000000e+01 : f32
    %48 = vector.broadcast %cst_17 : f32 to vector<2x8xf32>
    %49 = arith.addf %48, %47 : vector<2x8xf32>
    %50 = arith.subf %22, %49 : vector<2x8xf32>
    %51 = vector.shape_cast %50 : vector<2x8xf32> to vector<2x1x8xf32>
    %c0_18 = arith.constant 0 : index
    %c0_19 = arith.constant 0 : index
    %c0_20 = arith.constant 0 : index
    %52 = vector.load %arg3[%c0_18, %c0_19, %c0_20] : memref<2x1x8xf32, #tpu.memory_space<vmem>>, vector<2x1x8xf32>
    tpu.vector_store %arg3[%c0_18, %c0_19, %c0_20], %51 {strides = array<i32>} : memref<2x1x8xf32, #tpu.memory_space<vmem>>, vector<2x1x8xf32>,
    return
  }
  func.func @transform_0(%arg0: i32) -> (i32, i32, i32) {
    %c0_i32 = arith.constant 0 : i32
    %c0_i32_0 = arith.constant 0 : i32
    %c0_i32_1 = arith.constant 0 : i32
    return %arg0, %c0_i32, %c0_i32_0 : i32, i32, i32
  }
  func.func @transform_1(%arg0: i32) -> (i32, i32, i32) {
    %c0_i32 = arith.constant 0 : i32
    %c0_i32_0 = arith.constant 0 : i32
    %c0_i32_1 = arith.constant 0 : i32
    return %arg0, %c0_i32, %c0_i32_0 : i32, i32, i32
  }
  func.func @transform_2(%arg0: i32) -> (i32, i32, i32) {
    %c0_i32 = arith.constant 0 : i32
    %c0_i32_0 = arith.constant 0 : i32
    %c0_i32_1 = arith.constant 0 : i32
    return %arg0, %c0_i32, %c0_i32_0 : i32, i32, i32
  }
}

</mosaic_0001>

<llo_original>
// kernel: tpu_custom_call.1
$region0: #{tpu_custom_call.1}
  #allocation0 [shape = 'u32[]', space=smem, size = 0x4, offset = 0x4, fixed_abs, tag = 'smem constant byte address 0x4 - core index']
  #allocation1 [shape = 'u32[144,128]{1,0:T(1,128)}', space=vmem, size = 0x12000, scoped, tag = 'internal scratch']
  %s0 = inlined_call_operand.hbm [shape: f32[4,4,32], index: 0, kind: input, shape index: {}]
  %s1 = inlined_call_operand.hbm [shape: f32[4,4,32], index: 1, kind: input, shape index: {}]
  %s2 = inlined_call_operand.hbm [shape: f32[4,1,8], index: 2, kind: output, shape index: {}]
  %s3 = sld [smem:[#allocation0]]
  $region49: #{tpu_custom_call.1} parent=0
    _
  %s5 = ssub.s32 1, %s3
  %s6 = scalar_select 0, %s5, %s3
  $region1: #{tpu_custom_call.1} parent=0
    #allocation2 [shape = 'u8[8192]{0}', space=vmem, size = 0x2000, scoped, tag = 'input window, operand 0']
    #allocation3 [shape = 's32[2]{0}', space=sflag, size = 0x8, scoped, tag = 'scoped memory for tpu_custom_call.1']
    #allocation4 [shape = 's32[2]{0}', space=sflag, size = 0x8, scoped, tag = 'scoped memory for tpu_custom_call.1']
    #allocation5 [shape = 'u8[8192]{0}', space=vmem, size = 0x2000, scoped, tag = 'input window, operand 1']
    #allocation6 [shape = 's32[2]{0}', space=sflag, size = 0x8, scoped, tag = 'scoped memory for tpu_custom_call.1']
    #allocation7 [shape = 'u8[2048]{0}', space=vmem, size = 0x800, scoped, tag = 'output window, operand 0']
    %7 = vsyncpa [#allocation3], 0
    %s8 = scalar_lea.sflag [#allocation3], 1
    %9 = vsyncpa %s8, 0
    %10 = vsyncpa [#allocation6], 0
    %s11 = scalar_lea.sflag [#allocation6], 1
    %12 = vsyncpa %s11, 0
    %13 = vsyncpa [#allocation4], 0
    %s14 = scalar_lea.sflag [#allocation4], 1
    %15 = vsyncpa %s14, 0
    loop: start=0, step=1, limit=4
    $region2: #{tpu_custom_call.1} parent=1 // loop_pre_header
      _
    $region3: #{tpu_custom_call.1} parent=1 // loop_header
      %s17 = sphi 0, %s21
      %p18 = scmp.ge.s32.totalorder %s17, 4
      %s27 = sphi 0, %s29
      %s30 = sphi 0, %s27
      %s31 = sphi 0, %s30
      %s47 = sphi 0, %s31
      %s53 = sphi 0, %s55
      %s56 = sphi 0, %s53
      %s57 = sphi 0, %s56
      %s73 = sphi 0, %s57
      %s79 = sphi 0, %s81
      %s82 = sphi 0, %s79
      %s83 = sphi 0, %s82
      %s99 = sphi 0, %s83
    $region4: #{tpu_custom_call.1} parent=1 // loop_header_branch
      %20 = sbr.rel (%p18) target = $region8
    $region5: #{tpu_custom_call.1} parent=1 // loop_body
      %s22 = ssub.s32 %s17, 1
      %s23 = ssub.s32 %s17, 2
      %s24 = sadd.s32 %s17, 1
      %s25 = ssub.s32 %s17, %s24
      %p26 = scmp.eq.s32.totalorder %s25, 0
      %s28 = sadd.s32 %s27, 1
      %s29 = scalar_select %p26, %s27, %s28
      %p32 = pneg %p26
      %p33 = scmp.eq.s32.totalorder %s17, 1
      %p34 = por %p32, %p33
      %p35 = scmp.ne.s32.totalorder %s27, %s30
      %p36 = scmp.eq.s32.totalorder %s17, 0
      %p37 = por %p35, %p36
      %p38 = scmp.ne.s32.totalorder %s27, %s30
      %p39 = scmp.eq.s32.totalorder %s22, 1
      %p40 = por %p38, %p39
      %p41 = scmp.ne.s32.totalorder %s30, %s31
      %p42 = scmp.eq.s32.totalorder %s22, 0
      %p43 = por %p41, %p42
      %p44 = scmp.ne.s32.totalorder %s30, %s31
      %p45 = scmp.eq.s32.totalorder %s23, 1
      %p46 = por %p44, %p45
      %p48 = scmp.ne.s32.totalorder %s31, %s47
      %p49 = scmp.eq.s32.totalorder %s23, 0
      %p50 = por %p48, %p49
      %s51 = ssub.s32 %s17, %s24
      %p52 = scmp.eq.s32.totalorder %s51, 0
      %s54 = sadd.s32 %s53, 1
      %s55 = scalar_select %p52, %s53, %s54
      %p58 = pneg %p52
      %p59 = scmp.eq.s32.totalorder %s17, 1
      %p60 = por %p58, %p59
      %p61 = scmp.ne.s32.totalorder %s53, %s56
      %p62 = scmp.eq.s32.totalorder %s17, 0
      %p63 = por %p61, %p62
      %p64 = scmp.ne.s32.totalorder %s53, %s56
      %p65 = scmp.eq.s32.totalorder %s22, 1
      %p66 = por %p64, %p65
      %p67 = scmp.ne.s32.totalorder %s56, %s57
      %p68 = scmp.eq.s32.totalorder %s22, 0
      %p69 = por %p67, %p68
      %p70 = scmp.ne.s32.totalorder %s56, %s57
      %p71 = scmp.eq.s32.totalorder %s23, 1
      %p72 = por %p70, %p71
      %p74 = scmp.ne.s32.totalorder %s57, %s73
      %p75 = scmp.eq.s32.totalorder %s23, 0
      %p76 = por %p74, %p75
      %s77 = ssub.s32 %s17, %s24
      %p78 = scmp.eq.s32.totalorder %s77, 0
      %s80 = sadd.s32 %s79, 1
      %s81 = scalar_select %p78, %s79, %s80
      %p84 = pneg %p78
      %p85 = scmp.eq.s32.totalorder %s17, 1
      %p86 = por %p84, %p85
      %p87 = scmp.ne.s32.totalorder %s79, %s82
      %p88 = scmp.eq.s32.totalorder %s17, 0
      %p89 = por %p87, %p88
      %p90 = scmp.ne.s32.totalorder %s79, %s82
      %p91 = scmp.eq.s32.totalorder %s22, 1
      %p92 = por %p90, %p91
      %p93 = scmp.ne.s32.totalorder %s82, %s83
      %p94 = scmp.eq.s32.totalorder %s22, 0
      %p95 = por %p93, %p94
      %p96 = scmp.ne.s32.totalorder %s82, %s83
      %p97 = scmp.eq.s32.totalorder %s23, 1
      %p98 = por %p96, %p97
      %p100 = scmp.ne.s32.totalorder %s83, %s99
      %p101 = scmp.eq.s32.totalorder %s23, 0
      %p102 = por %p100, %p101
      %p103 = scmp.le.s32.totalorder 1, %s17
      %p104 = scmp.lt.s32.totalorder %s17, 3
      %p105 = pnand %p103, %p104
      %p106 = pneg %p105
      // Predicated region
      $region9: #{tpu_custom_call.1} parent=5 // pred_check
        _
      $region10: #{tpu_custom_call.1} parent=5 // pred_check_branch
        %108 = sbr.rel (%p105) target = $region12
      $region11: #{tpu_custom_call.1} parent=5 // pred_region
        %s109 = ssub.s32 %s17, 1
      $region12: #{tpu_custom_call.1} parent=5 // pred_fallthru
        _
      %p110 = scmp.lt.s32.totalorder %s17, 2
      // Predicated region
      $region13: #{tpu_custom_call.1} parent=5 // pred_check
        %p111 = pneg %p110
      $region14: #{tpu_custom_call.1} parent=5 // pred_check_branch
        %113 = sbr.rel (%p111) target = $region16
      $region15: #{tpu_custom_call.1} parent=5 // pred_region
        // Predicated region
        $region17: #{tpu_custom_call.1} parent=15 // pred_check
          %p114 = pneg %p37
        $region18: #{tpu_custom_call.1} parent=15 // pred_check_branch
          %116 = sbr.rel (%p114) target = $region20
        $region19: #{tpu_custom_call.1} parent=15 // pred_region
          %s117 = sand.u32 %s27, 1
          %s118 = scalar_lea.sflag [#allocation3], %s117
          %s119 = sand.u32 %s27, 1
          %s120 = smul.addr %s119, 8
          %s121 = scalar_lea.vmem [#allocation2], %s120
          %s122 = smul.u32 2, %s17
          %s124 = ssub.s32 128, 128
          %125 = vsyncadd %s118, %s124
          %s126 = smul.addr %s122, 64
          %s127 = scalar_lea.hbm %s0, %s126
          %s128 = sshll.u32 %s121, 4
          %s129 = int_to_ptr.vmem [resolvable:$true] %s128
          %134 = dma.hbm_to_vmem [thread:$0]  %s127, 128, %s129, %s118, 64, 64, 4
        $region20: #{tpu_custom_call.1} parent=15 // pred_fallthru
          _
        // Predicated region
        $region21: #{tpu_custom_call.1} parent=15 // pred_check
          %p135 = pneg %p63
        $region22: #{tpu_custom_call.1} parent=15 // pred_check_branch
          %137 = sbr.rel (%p135) target = $region24
        $region23: #{tpu_custom_call.1} parent=15 // pred_region
          %s138 = sand.u32 %s53, 1
          %s139 = scalar_lea.sflag [#allocation6], %s138
          %s140 = sand.u32 %s53, 1
          %s141 = smul.addr %s140, 8
          %s142 = scalar_lea.vmem [#allocation5], %s141
          %s143 = smul.u32 2, %s17
          %s145 = ssub.s32 128, 128
          %146 = vsyncadd %s139, %s145
          %s147 = smul.addr %s143, 64
          %s148 = scalar_lea.hbm %s1, %s147
          %s149 = sshll.u32 %s142, 4
          %s150 = int_to_ptr.vmem [resolvable:$true] %s149
          %155 = dma.hbm_to_vmem [thread:$0]  %s148, 128, %s150, %s139, 64, 64, 4
        $region24: #{tpu_custom_call.1} parent=15 // pred_fallthru
          _
      $region16: #{tpu_custom_call.1} parent=5 // pred_fallthru
        _
      %p156 = scmp.le.s32.totalorder 1, %s17
      %p157 = scmp.lt.s32.totalorder %s17, 3
      %p158 = pnand %p156, %p157
      %p159 = pneg %p158
      // Predicated region
      $region25: #{tpu_custom_call.1} parent=5 // pred_check
        _
      $region26: #{tpu_custom_call.1} parent=5 // pred_check_branch
        %161 = sbr.rel (%p158) target = $region28
      $region27: #{tpu_custom_call.1} parent=5 // pred_region
        %s162 = ssub.s32 %s17, 1
        %s163 = sand.u32 %s30, 1
        %s164 = scalar_lea.sflag [#allocation3], %s163
        %s165 = sand.u32 %s30, 1
        %s166 = smul.addr %s165, 8
        %s167 = scalar_lea.vmem [#allocation2], %s166
        // Predicated region
        $region29: #{tpu_custom_call.1} parent=27 // pred_check
          %p168 = pneg %p43
        $region30: #{tpu_custom_call.1} parent=27 // pred_check_branch
          %170 = sbr.rel (%p168) target = $region32
        $region31: #{tpu_custom_call.1} parent=27 // pred_region
          %171 = dma.done %s164, 128
        $region32: #{tpu_custom_call.1} parent=27 // pred_fallthru
          _
        %s172 = sand.u32 %s56, 1
        %s173 = scalar_lea.sflag [#allocation6], %s172
        %s174 = sand.u32 %s56, 1
        %s175 = smul.addr %s174, 8
        %s176 = scalar_lea.vmem [#allocation5], %s175
        // Predicated region
        $region33: #{tpu_custom_call.1} parent=27 // pred_check
          %p177 = pneg %p69
        $region34: #{tpu_custom_call.1} parent=27 // pred_check_branch
          %179 = sbr.rel (%p177) target = $region36
        $region35: #{tpu_custom_call.1} parent=27 // pred_region
          %180 = dma.done %s173, 128
        $region36: #{tpu_custom_call.1} parent=27 // pred_fallthru
          _
        %s181 = sand.u32 %s30, 1
        %s182 = scalar_lea.sflag [#allocation3], %s181
        %s183 = sand.u32 %s30, 1
        %s184 = smul.addr %s183, 8
        %s185 = scalar_lea.vmem [#allocation2], %s184
        %p186 = pneg %p43
        %p187 = pneg %p40
        %s188 = sand.u32 %s56, 1
        %s189 = scalar_lea.sflag [#allocation6], %s188
        %s190 = sand.u32 %s56, 1
        %s191 = smul.addr %s190, 8
        %s192 = scalar_lea.vmem [#allocation5], %s191
        %p193 = pneg %p69
        %p194 = pneg %p66
        %p195 = pneg %p95
        %p196 = pneg %p92
        %s197 = sand.u32 %s82, 1
        %s198 = scalar_lea.sflag [#allocation4], %s197
        %s199 = sand.u32 %s82, 1
        %s200 = smul.addr %s199, 2
        %s201 = scalar_lea.vmem [#allocation7], %s200
        %s202 = smul.u32 2, %s22
        %s203 = smul.u32 2, %s22
        %s204 = smul.u32 2, %s22
        %v206 = vld [vmem:[%s167] sm:$0xf]
        %v207 = vld [vmem:[%s167 + $0x4] sm:$0xf]
        %v208 = vld [vmem:[%s176] sm:$0xf]
        %v209 = vld [vmem:[%s176 + $0x4] sm:$0xf]
        %v210 = vmul.f32 %v206, %v206
        %v211 = vmul.f32 %v207, %v207
        %vm212 = vcmask 257024
        %v213 = vsel %vm212, %v210, 0.0
        %214 = vadd.xlane.f32.xlu0 %v213
        %v215 = vpop.xlane.xlu0 %214
        %v216 = vsel %vm212, %v211, 0.0
        %217 = vadd.xlane.f32.xlu0 %v216
        %v218 = vpop.xlane.xlu0 %217
        %v219 = vmax.f32 %v215, 1e-24
        %v220 = vmax.f32 %v218, 1e-24
        %v221 = vrsqrt.pop %v219
        %v222 = vrsqrt.pop %v220
        %v223 = vmul.f32 %v206, %v221
        %v224 = vmul.f32 %v207, %v222
        %v225 = vmul.f32 %v208, %v208
        %v226 = vmul.f32 %v209, %v209
        %v227 = vsel %vm212, %v225, 0.0
        %228 = vadd.xlane.f32.xlu0 %v227
        %v229 = vpop.xlane.xlu0 %228
        %v230 = vsel %vm212, %v226, 0.0
        %231 = vadd.xlane.f32.xlu0 %v230
        %v232 = vpop.xlane.xlu0 %231
        %v233 = vmax.f32 %v229, 1e-24
        %v234 = vmax.f32 %v232, 1e-24
        %v235 = vrsqrt.pop %v233
        %v236 = vrsqrt.pop %v234
        %v237 = vmul.f32 %v208, %v235
        %v238 = vmul.f32 %v209, %v236
        %v239 = vmul.f32 %v223, %v237
        %v240 = vmul.f32 %v224, %v238
        %v241 = vsel %vm212, %v239, 0.0
        %242 = vadd.xlane.f32.xlu0 %v241
        %v243 = vpop.xlane.xlu0 %242
        %v244 = vsel %vm212, %v240, 0.0
        %245 = vadd.xlane.f32.xlu0 %v244
        %v246 = vpop.xlane.xlu0 %245
        %v247 = vmul.f32 %v243, 10.0
        %v248 = vmul.f32 %v246, 10.0
        %v251 = vlaneseq
        %v252 = vand.u32 %v251, 127
        %v253 = vlaneseq
        %v254 = vshrl.u32 %v253, 7
        %v255 = vsub.s32 %v252, %v254
        %v256 = vrot.slane %v247, %v255
        %v257 = vlaneseq
        %v258 = vshrl.u32 %v257, 7
        %v259 = vsub.s32 %v252, %v258
        %v260 = vrot.slane %v248, %v259
        %vm261 = vcmask 1041409
        %v262 = vsel %vm261, %v260, %v256
        %v264 = vadd.s32 %v252, 4294967292
        %v265 = vlaneseq
        %v266 = vshrl.u32 %v265, 7
        %v267 = vsub.s32 %v264, %v266
        %v268 = vrot.slane %v247, %v267
        %v269 = vlaneseq
        %v270 = vshrl.u32 %v269, 7
        %v271 = vsub.s32 %v264, %v270
        %v272 = vrot.slane %v248, %v271
        %v273 = vsel %vm261, %v272, %v268
        %vm275 = vcmask 31744
        %v276 = vsel %vm275, %v262, %v273
        %v277 = vmul.f32 %v223, 10.0
        %v278 = vmul.f32 %v224, 10.0
        %v279 = vpack.c.bf16 %v277, %v277
        %v280 = vpack.c.bf16 %v278, %v278
        %v281 = vmul.f32 %v237, 10.0
        %v282 = vmul.f32 %v238, 10.0
        %v283 = vpack.c.bf16 %v281, %v281
        %v284 = vpack.c.bf16 %v282, %v282
        %v287 = vrot.slane %v283, 6
        %v288 = vrot.slane %v284, 6
        %vm289 = vcmask 1041408
        %v292 = vsel %vm289, %v279, %v287
        %v295 = vsel %vm289, %v280, %v288
        %v296 = vpack.c.bf16 %v223, %v223
        %v297 = vpack.c.bf16 %v224, %v224
        %v298 = vpack.c.bf16 %v237, %v237
        %v299 = vpack.c.bf16 %v238, %v238
        %v302 = vrot.slane %v298, 6
        %v303 = vrot.slane %v299, 6
        %v306 = vsel %vm289, %v296, %v302
        %v309 = vsel %vm289, %v297, %v303
        %v310 = vlaneseq
        %v311 = vshrl.u32 %v310, 7
        %vm312 = vcmp.eq.s32.totalorder %v311, %v252
        %v313 = vsel %vm312, -inf, 0.0
        %vm314 = vcmask 261120
        %v315 = vsel %vm314, %v292, 0
        %v317 = vsel %vm314, %v306, 0
        %319 = vmatprep.subr.bf16.mxu0 0
        %320 = vmatpush1.bf16.xpose.msra.mxu0 %v317
        %321 = vmatprep.subr.bf16.mxu0 0
        %322 = vmatpush1.bf16.xpose.msra.mxu0 0
        %323 = vmatprep.subr.bf16.mxu0 0
        %324 = vmatpush1.bf16.xpose.msra.mxu0 0
        %325 = vmatprep.subr.bf16.mxu0 0
        %326 = vmatpush1.bf16.xpose.msra.mxu0 0
        %327 = vmatprep.subr.bf16.mxu0 0
        %328 = vmatpush1.bf16.xpose.msra.mxu0 0
        %329 = vmatprep.subr.bf16.mxu0 0
        %330 = vmatpush1.bf16.xpose.msra.mxu0 0
        %331 = vmatprep.subr.bf16.mxu0 0
        %332 = vmatpush1.bf16.xpose.msra.mxu0 0
        %333 = vmatprep.subr.bf16.mxu0 0
        %334 = vmatpush1.bf16.xpose.msra.mxu0 0
        %335 = vmatprep.subr.bf16.mxu0 0
        %336 = vmatpush1.bf16.xpose.msra.mxu0 0
        %337 = vmatprep.subr.bf16.mxu0 0
        %338 = vmatpush1.bf16.xpose.msra.mxu0 0
        %339 = vmatprep.subr.bf16.mxu0 0
        %340 = vmatpush1.bf16.xpose.msra.mxu0 0
        %341 = vmatprep.subr.bf16.mxu0 0
        %342 = vmatpush1.bf16.xpose.msra.mxu0 0
        %343 = vmatprep.subr.bf16.mxu0 0
        %344 = vmatpush1.bf16.xpose.msra.mxu0 0
        %345 = vmatprep.subr.bf16.mxu0 0
        %346 = vmatpush1.bf16.xpose.msra.mxu0 0
        %347 = vmatprep.subr.bf16.mxu0 0
        %348 = vmatpush1.bf16.xpose.msra.mxu0 0
        %349 = vmatprep.subr.bf16.mxu0 0
        %350 = vmatpush1.bf16.xpose.msra.mxu0 0
        %351 = vmatprep.mubr.bf16.mxu0 0
        %352 = vmatmul.mubr.bf16.gmra.mrb[0].mxu0 %v315
        %v353 = vpop.f32.mrb[0].mxu0
        %v354 = vadd.f32 %v313, %v353
        %v355 = vpop.f32.mrb[0].mxu0
        %v356 = vpop.f32.mrb[0].mxu0
        %v357 = vpop.f32.mrb[0].mxu0
        %358 = vdwg.mxu0
        %v359 = vsel %vm314, %v295, 0
        %v361 = vsel %vm314, %v309, 0
        %363 = vmatprep.subr.bf16.mxu0 0
        %364 = vmatpush1.bf16.xpose.msra.mxu0 %v361
        %365 = vmatprep.subr.bf16.mxu0 0
        %366 = vmatpush1.bf16.xpose.msra.mxu0 0
        %367 = vmatprep.subr.bf16.mxu0 0
        %368 = vmatpush1.bf16.xpose.msra.mxu0 0
        %369 = vmatprep.subr.bf16.mxu0 0
        %370 = vmatpush1.bf16.xpose.msra.mxu0 0
        %371 = vmatprep.subr.bf16.mxu0 0
        %372 = vmatpush1.bf16.xpose.msra.mxu0 0
        %373 = vmatprep.subr.bf16.mxu0 0
        %374 = vmatpush1.bf16.xpose.msra.mxu0 0
        %375 = vmatprep.subr.bf16.mxu0 0
        %376 = vmatpush1.bf16.xpose.msra.mxu0 0
        %377 = vmatprep.subr.bf16.mxu0 0
        %378 = vmatpush1.bf16.xpose.msra.mxu0 0
        %379 = vmatprep.subr.bf16.mxu0 0
        %380 = vmatpush1.bf16.xpose.msra.mxu0 0
        %381 = vmatprep.subr.bf16.mxu0 0
        %382 = vmatpush1.bf16.xpose.msra.mxu0 0
        %383 = vmatprep.subr.bf16.mxu0 0
        %384 = vmatpush1.bf16.xpose.msra.mxu0 0
        %385 = vmatprep.subr.bf16.mxu0 0
        %386 = vmatpush1.bf16.xpose.msra.mxu0 0
        %387 = vmatprep.subr.bf16.mxu0 0
        %388 = vmatpush1.bf16.xpose.msra.mxu0 0
        %389 = vmatprep.subr.bf16.mxu0 0
        %390 = vmatpush1.bf16.xpose.msra.mxu0 0
        %391 = vmatprep.subr.bf16.mxu0 0
        %392 = vmatpush1.bf16.xpose.msra.mxu0 0
        %393 = vmatprep.subr.bf16.mxu0 0
        %394 = vmatpush1.bf16.xpose.msra.mxu0 0
        %395 = vmatprep.mubr.bf16.mxu0 0
        %396 = vmatmul.mubr.bf16.gmra.mrb[0].mxu0 %v359
        %v397 = vpop.f32.mrb[0].mxu0
        %v398 = vadd.f32 %v313, %v397
        %v399 = vpop.f32.mrb[0].mxu0
        %v400 = vpop.f32.mrb[0].mxu0
        %v401 = vpop.f32.mrb[0].mxu0
        %402 = vdwg.mxu0
        %v403 = vsub.f32 %v354, 10.0
        %v404 = vsub.f32 %v398, 10.0
        %v405 = vmul.f32 %v403, 1.442695
        %v406 = vpow.pop %v405
        %v407 = vmul.f32 %v404, 1.442695
        %v408 = vpow.pop %v407
        %vm409 = vcmask 64512
        %v410 = vsel %vm409, %v406, 0.0
        %411 = vadd.xlane.f32.xlu0 %v410
        %v412 = vpop.xlane.xlu0 %411
        %v413 = vsel %vm409, %v408, 0.0
        %414 = vadd.xlane.f32.xlu0 %v413
        %v415 = vpop.xlane.xlu0 %414
        %v416 = vlog2.pop %v412
        %v417 = vmul.f32 %v416, 0.6931472
        %v418 = vlog2.pop %v415
        %v419 = vmul.f32 %v418, 0.6931472
        %v420 = vadd.f32 %v417, 10.0
        %v421 = vadd.f32 %v419, 10.0
        %v424 = vlaneseq
        %v425 = vshrl.u32 %v424, 7
        %v426 = vsub.s32 %v252, %v425
        %v427 = vrot.slane %v420, %v426
        %v428 = vlaneseq
        %v429 = vshrl.u32 %v428, 7
        %v430 = vsub.s32 %v252, %v429
        %v431 = vrot.slane %v421, %v430
        %v432 = vsel %vm261, %v431, %v427
        %v434 = vsub.f32 %v276, %v432
        %v437 = vunpack.c.l.s4 1966171168
        %v438 = vunpack.c.0.s8 %v437
        %v439 = vlaneseq
        %v440 = vshrl.u32 %v439, 7
        %v441 = vsub.s32 %v438, %v440
        %v442 = vrot.slane %v434, %v441
        %v443 = vcombine.high %v442, %v442
        %v445 = vunpack.c.l.s4 1966171168
        %v446 = vunpack.c.0.s8 %v445
        %v447 = vlaneseq
        %v448 = vshrl.u32 %v447, 7
        %v449 = vsub.s32 %v446, %v448
        %v450 = vrot.slane %v442, %v449
        %v452 = vunpack.c.l.s4 1966171168
        %v453 = vunpack.c.0.s8 %v452
        %v454 = vlaneseq
        %v455 = vshrl.u32 %v454, 7
        %v456 = vsub.s32 %v453, %v455
        %v457 = vrot.slane %v443, %v456
        %vm460 = vcmask 57344
        %461 = vst.msk [vmem:[%s201] sm:$0x1] %vm460, %v450
        %462 = vst.msk [vmem:[%s201 + $0x1] sm:$0x1] %vm460, %v457
        %s463 = sand.u32 %s82, 1
        %s464 = scalar_lea.sflag [#allocation4], %s463
        %s465 = sand.u32 %s82, 1
        %s466 = smul.addr %s465, 2
        %s467 = scalar_lea.vmem [#allocation7], %s466
        // Predicated region
        $region37: #{tpu_custom_call.1} parent=27 // pred_check
          %p468 = pneg %p92
        $region38: #{tpu_custom_call.1} parent=27 // pred_check_branch
          %470 = sbr.rel (%p468) target = $region40
        $region39: #{tpu_custom_call.1} parent=27 // pred_region
          %s471 = smul.u32 2, %s22
          %s473 = ssub.s32 32, 32
          %474 = vsyncadd %s464, %s473
          %s475 = smul.addr %s471, 16
          %s476 = scalar_lea.hbm %s2, %s475
          %s477 = sshll.u32 %s467, 4
          %s478 = int_to_ptr.vmem [resolvable:$true] %s477
          %483 = dma.vmem_to_hbm [thread:$0]  %s478, 32, %s476, %s464, 16, 16, 1
        $region40: #{tpu_custom_call.1} parent=27 // pred_fallthru
          _
      $region28: #{tpu_custom_call.1} parent=5 // pred_fallthru
        _
      %p484 = scmp.le.s32.totalorder 2, %s17
      // Predicated region
      $region41: #{tpu_custom_call.1} parent=5 // pred_check
        %p485 = pneg %p484
      $region42: #{tpu_custom_call.1} parent=5 // pred_check_branch
        %487 = sbr.rel (%p485) target = $region44
      $region43: #{tpu_custom_call.1} parent=5 // pred_region
        %s488 = ssub.s32 %s17, 2
        // Predicated region
        $region45: #{tpu_custom_call.1} parent=43 // pred_check
          %p489 = pneg %p98
        $region46: #{tpu_custom_call.1} parent=43 // pred_check_branch
          %491 = sbr.rel (%p489) target = $region48
        $region47: #{tpu_custom_call.1} parent=43 // pred_region
          %s492 = sand.u32 %s83, 1
          %s493 = scalar_lea.sflag [#allocation4], %s492
          %s494 = sand.u32 %s83, 1
          %s495 = smul.addr %s494, 2
          %s496 = scalar_lea.vmem [#allocation7], %s495
          %497 = dma.done %s493, 32
        $region48: #{tpu_custom_call.1} parent=43 // pred_fallthru
          _
      $region44: #{tpu_custom_call.1} parent=5 // pred_fallthru
        _
    $region6: #{tpu_custom_call.1} parent=1 // loop_footer
      %s21 = sadd.s32 1, %s17
    $region7: #{tpu_custom_call.1} parent=1 // loop_footer_branch
      %16 = sbr.rel target = $region3
    $region8: #{tpu_custom_call.1} parent=1 // loop_exit
      _
    %498 = vsyncpa [#allocation3], 1
    %s499 = scalar_lea.sflag [#allocation3], 1
    %500 = vsyncpa %s499, 1
    %501 = vsyncpa [#allocation6], 1
    %s502 = scalar_lea.sflag [#allocation6], 1
    %503 = vsyncpa %s502, 1
    %504 = vsyncpa [#allocation4], 1
    %s505 = scalar_lea.sflag [#allocation4], 1
    %506 = vsyncpa %s505, 1

</llo_original>
